<compile_context>
chip_gen: v6e
topology: v6e:2x2x1
jax: 0.10.0
libtpu: 0.0.40
codegen_flags: <defaults>
</compile_context>

<pallas_src>
import jax
import jax.numpy as jnp
from jax import lax
from jax.experimental import pallas as pl
from jax.experimental.pallas import tpu as pltpu

NEG_MASK = -100000000.0
LANES = 128
LOSS_BLOCK = (8, 128)     # lane-dense per-grid-step loss partial-sum slab
MAX_TILE_N = 16384        # absolute cap on rows per grid step


def _round_up(x, m):
    return ((x + m - 1) // m) * m


def _vmem_budgets():
    """(double-buffered block budget, scoped vmem limit) per TPU generation."""
    try:
        cap = pltpu.get_tpu_info().vmem_capacity_bytes
    except Exception:
        cap = 64 * 1024 * 1024                       # assume smallest (v7x-like)
    budget = max(8 * 1024 * 1024, min(cap * 3 // 8, 48 * 1024 * 1024))
    limit = max(budget * 2, min(cap * 3 // 4, 96 * 1024 * 1024))
    return budget, limit


def _choose_tile_n(n, c, with_desc, with_targets, budget):
    """Biggest 8-aligned row tile whose double-buffered blocks fit `budget`."""
    def row_bytes(width):
        # VMEM stores f32/int32 in (8,128) tiles: a (rows, width) block costs
        # 512 * ceil(width/128) bytes per row regardless of the HBM width.
        return 512 * ((width + LANES - 1) // LANES)

    per_row = row_bytes(c) + row_bytes(c + 1)        # pem block + logits block
    if with_desc:
        per_row += row_bytes(c + 1)                  # description-scores block
    if with_targets:
        per_row += row_bytes(1)                      # (tile_n,1) int32 targets
    tile = budget // (2 * per_row)                   # 2x for double buffering
    tile = min(tile, MAX_TILE_N)
    # Keep >= 2 grid steps whenever N allows it so v7x megacore can shard.
    tile = min(tile, max(8, _round_up(-(-n // 2), 8)))
    return max(8, (tile // 8) * 8)


def _make_ed_kernel(num_cands, num_rows, tile_n, use_desc, with_loss):
    """Build the fused Linear(2,1) + NOTA column + -1e8 mask (+ CE loss) kernel."""
    c = num_cands

    def kernel(params_ref, *refs):
        it = iter(refs)
        pem_ref = next(it)
        desc_ref = next(it) if use_desc else None
        tgt_ref = next(it) if with_loss else None
        logits_ref = next(it)
        loss_ref = next(it) if with_loss else None

        w_pem = params_ref[0]
        b = params_ref[2]

        pem = pem_ref[...]                                   # (tile_n, C) f32
        raw = pem * w_pem + b
        if use_desc:
            w_desc = params_ref[1]
            raw = raw + desc_ref[:, :c] * w_desc             # last desc col unused
        main = jnp.where(pem == 0.0, NEG_MASK, raw)          # mask P(e|m)==0 cands

        # Real-candidate logits + hard-coded 0.0 "none of the above" column.
        logits_ref[:, :c] = main
        logits_ref[:, c:] = jnp.zeros((pem.shape[0], 1), jnp.float32)

        if with_loss:
            tgt = tgt_ref[...]                               # (tile_n, 1) int32
            # log-sum-exp over [main, 0] without materializing the NOTA column.
            m = jnp.maximum(jnp.max(main, axis=1, keepdims=True), 0.0)
            sum_exp = (jnp.sum(jnp.exp(main - m), axis=1, keepdims=True)
                       + jnp.exp(-m))
            lse = m + jnp.log(sum_exp)
            col = lax.broadcasted_iota(jnp.int32, main.shape, 1)
            picked = jnp.sum(jnp.where(col == tgt, main, 0.0),
                             axis=1, keepdims=True)
            true_logit = jnp.where(tgt == c, 0.0, picked)    # NOTA target -> 0.0
            # Guard rows of the ragged final block (no N padding in wrapper).
            row = (pl.program_id(0) * tile_n
                   + lax.broadcasted_iota(jnp.int32, (pem.shape[0], 1), 0))
            per_row = jnp.where(row < num_rows, lse - true_logit, 0.0)
            block_sum = jnp.sum(per_row)
            # Lane-dense partial-sum slab; wrapper sums the slabs and / N.
            scale = 1.0 / float(LOSS_BLOCK[0] * LOSS_BLOCK[1])
            loss_ref[...] = jnp.full(LOSS_BLOCK, block_sum * scale, jnp.float32)

    return kernel


def entity_disambiguation_forward(weight, bias, candidate_pem_values,
                                  candidate_description_scores,
                                  candidate_entity_targets=None,
                                  ignore_descriptions=False):
    """JAX wrapper mirroring EntityDisambiguation_withoutET.forward (eval mode)."""
    pem = candidate_pem_values.astype(jnp.float32)           # (N, C)
    n, c = pem.shape
    cp1 = c + 1
    use_desc = not ignore_descriptions
    with_loss = candidate_entity_targets is not None

    budget, vmem_limit = _vmem_budgets()
    tile_n = _choose_tile_n(n, c, use_desc, with_loss, budget)
    grid = (pl.cdiv(n, tile_n),)

    # Linear(2,1) parameters [w_pem, w_desc, bias] live in SMEM (12 bytes).
    params = jnp.concatenate(
        [weight.reshape(-1), bias.reshape(-1)]).astype(jnp.float32)

    smem_spec = pl.BlockSpec(memory_space=pltpu.MemorySpace.SMEM)
    pem_spec = pl.BlockSpec((tile_n, c), lambda i: (i, 0))
    wide_spec = pl.BlockSpec((tile_n, cp1), lambda i: (i, 0))  # desc / logits

    in_specs = [smem_spec, pem_spec]
    inputs = [params, pem]
    if use_desc:
        desc = candidate_description_scores.astype(jnp.float32)   # (N, C+1)
        in_specs.append(wide_spec)
        inputs.append(desc)

    compiler_params = pltpu.CompilerParams(
        dimension_semantics=("parallel",),          # megacore sharding on v7x
        vmem_limit_bytes=int(vmem_limit))

    kernel = _make_ed_kernel(c, n, tile_n, use_desc, with_loss)
    stream_bytes = 4 * n * (c + cp1 + (cp1 if use_desc else 0))

    if not with_loss:
        logits = pl.pallas_call(
            kernel,
            out_shape=jax.ShapeDtypeStruct((n, cp1), jnp.float32),
            grid_spec=pltpu.PrefetchScalarGridSpec(
                num_scalar_prefetch=0, grid=grid,
                in_specs=in_specs, out_specs=wide_spec),
            compiler_params=compiler_params,
            cost_estimate=pl.CostEstimate(
                flops=8 * n * cp1, transcendentals=0,
                bytes_accessed=stream_bytes),
        )(*inputs)
        return None, logits

    # Reduce the one-hot targets to one int32 index per row (cheap XLA argmax).
    tgt_idx = jnp.argmax(candidate_entity_targets, axis=1)
    tgt_idx = tgt_idx.astype(jnp.int32).reshape(n, 1)
    tgt_spec = pl.BlockSpec((tile_n, 1), lambda i: (i, 0))
    loss_spec = pl.BlockSpec(LOSS_BLOCK, lambda i: (i, 0))
    in_specs.append(tgt_spec)
    inputs.append(tgt_idx)

    logits, loss_parts = pl.pallas_call(
        kernel,
        out_shape=(
            jax.ShapeDtypeStruct((n, cp1), jnp.float32),
            jax.ShapeDtypeStruct((grid[0] * LOSS_BLOCK[0], LOSS_BLOCK[1]),
                                 jnp.float32),
        ),
        grid_spec=pltpu.PrefetchScalarGridSpec(
            num_scalar_prefetch=0, grid=grid,
            in_specs=in_specs, out_specs=(wide_spec, loss_spec)),
        compiler_params=compiler_params,
        cost_estimate=pl.CostEstimate(
            flops=16 * n * cp1, transcendentals=2 * n * cp1,
            bytes_accessed=stream_bytes + 4 * n
            + 4 * grid[0] * LOSS_BLOCK[0] * LOSS_BLOCK[1]),
    )(*inputs)

    loss = jnp.sum(loss_parts) / n
    return loss, logits


if __name__ == "__main__":
    key = jax.random.PRNGKey(0)
    kw, kp, km, kd, kt = jax.random.split(key, 5)

    def reference(weight, bias, pem, desc, tgt_idx=None, ignore_descriptions=False):
        n, c = pem.shape
        if ignore_descriptions:
            desc = jnp.zeros_like(desc)
        raw = pem * weight[0, 0] + desc[:, :c] * weight[0, 1] + bias[0]
        logits_full = jnp.concatenate([raw, jnp.zeros((n, 1), jnp.float32)], axis=1)
        pem_full = jnp.concatenate([pem, jnp.ones((n, 1), jnp.float32)], axis=1)
        mask = jnp.where(pem_full == 0.0, NEG_MASK, 0.0)
        ref_logits = logits_full * (mask == 0.0).astype(jnp.float32) + mask
        if tgt_idx is None:
            return None, ref_logits
        loss = jnp.mean(
            -jax.nn.log_softmax(ref_logits, axis=1)[jnp.arange(n), tgt_idx])
        return loss, ref_logits

    # --- case 1: tiny shapes, training + inference paths ---------------------
    N, C = 8, 16
    weight = 0.02 * jax.random.normal(kw, (1, 2), jnp.float32)   # Linear(2,1).weight
    bias = jnp.zeros((1,), jnp.float32)                          # Linear(2,1).bias
    pem = jax.random.uniform(kp, (N, C), jnp.float32)
    pem = pem * (jax.random.uniform(km, (N, C)) > 0.3).astype(jnp.float32)
    desc = jax.random.normal(kd, (N, C + 1), jnp.float32)
    tgt_idx = jax.random.randint(kt, (N,), 0, C + 1)
    targets = jax.nn.one_hot(tgt_idx, C + 1, dtype=jnp.float32)

    loss, logits = entity_disambiguation_forward(weight, bias, pem, desc, targets)
    loss_none, logits_inf = entity_disambiguation_forward(weight, bias, pem, desc, None)
    jax.block_until_ready((loss, logits, logits_inf))

    ref_loss, ref_logits = reference(weight, bias, pem, desc, tgt_idx)
    assert logits.shape == (N, C + 1) and logits_inf.shape == (N, C + 1)
    assert loss.shape == () and loss_none is None
    assert jnp.allclose(logits, ref_logits, atol=1e-3, rtol=1e-5)
    assert jnp.allclose(logits_inf, ref_logits, atol=1e-3, rtol=1e-5)
    assert jnp.allclose(loss, ref_loss, atol=1e-4, rtol=1e-4)

    # --- case 2: ragged N, multi-step grid, ignore_descriptions path ---------
    N2, C2 = 300, 20
    k2 = jax.random.split(key, 4)
    pem2 = jax.random.uniform(k2[0], (N2, C2), jnp.float32)
    pem2 = pem2 * (jax.random.uniform(k2[1], (N2, C2)) > 0.4).astype(jnp.float32)
    desc2 = jax.random.normal(k2[2], (N2, C2 + 1), jnp.float32)
    tgt_idx2 = jax.random.randint(k2[3], (N2,), 0, C2 + 1)
    targets2 = jax.nn.one_hot(tgt_idx2, C2 + 1, dtype=jnp.float32)

    loss2, logits2 = entity_disambiguation_forward(weight, bias, pem2, desc2, targets2)
    _, logits2_nd = entity_disambiguation_forward(weight, bias, pem2, desc2, None,
                                                  ignore_descriptions=True)
    jax.block_until_ready((loss2, logits2, logits2_nd))

    ref_loss2, ref_logits2 = reference(weight, bias, pem2, desc2, tgt_idx2)
    _, ref_logits2_nd = reference(weight, bias, pem2, desc2, None,
                                  ignore_descriptions=True)
    assert logits2.shape == (N2, C2 + 1) and logits2_nd.shape == (N2, C2 + 1)
    assert jnp.allclose(logits2, ref_logits2, atol=1e-3, rtol=1e-5)
    assert jnp.allclose(loss2, ref_loss2, atol=1e-4, rtol=1e-4)
    assert jnp.allclose(logits2_nd, ref_logits2_nd, atol=1e-3, rtol=1e-5)

    print("KERNEL_OK")
</pallas_src>

<mosaic_0001>
module attributes {stable_mosaic.version = 11 : i64} {
  func.func @kernel(%arg0: i32, %arg1: memref<3xf32, #tpu.memory_space<smem>>, %arg2: memref<8x16xf32, #tpu.memory_space<vmem>>, %arg3: memref<8x17xf32, #tpu.memory_space<vmem>>, %arg4: memref<8x1xi32, #tpu.memory_space<vmem>>, %arg5: memref<8x17xf32, #tpu.memory_space<vmem>>, %arg6: memref<8x128xf32, #tpu.memory_space<vmem>>) attributes {dimension_semantics = [#tpu.dimension_semantics<parallel>], iteration_bounds = array<i64: 1>, scalar_prefetch = 0 : i64, scratch_operands = 0 : i64, tpu.core_type = #tpu.core_type<tc>, window_params = [{transform_indices = @transform_0, window_bounds = array<i64: 3>}, {transform_indices = @transform_1, window_bounds = array<i64: 8, 16>}, {transform_indices = @transform_2, window_bounds = array<i64: 8, 17>}, {transform_indices = @transform_3, window_bounds = array<i64: 8, 1>}, {transform_indices = @transform_4, window_bounds = array<i64: 8, 17>}, {transform_indices = @transform_5, window_bounds = array<i64: 8, 128>}]} {
    %c0 = arith.constant 0 : index
    %0 = memref.load %arg1[%c0] : memref<3xf32, #tpu.memory_space<smem>>
    %c2 = arith.constant 2 : index
    %1 = memref.load %arg1[%c2] : memref<3xf32, #tpu.memory_space<smem>>
    %c0_0 = arith.constant 0 : index
    %c0_1 = arith.constant 0 : index
    %2 = vector.load %arg2[%c0_0, %c0_1] : memref<8x16xf32, #tpu.memory_space<vmem>>, vector<8x16xf32>
    %3 = vector.broadcast %0 : f32 to vector<8x16xf32>
    %4 = arith.mulf %2, %3 : vector<8x16xf32>
    %5 = vector.broadcast %1 : f32 to vector<8x16xf32>
    %6 = arith.addf %4, %5 : vector<8x16xf32>
    %c1 = arith.constant 1 : index
    %7 = memref.load %arg1[%c1] : memref<3xf32, #tpu.memory_space<smem>>
    %c0_2 = arith.constant 0 : index
    %c0_3 = arith.constant 0 : index
    %8 = vector.load %arg3[%c0_2, %c0_3] : memref<8x17xf32, #tpu.memory_space<vmem>>, vector<8x16xf32>
    %9 = vector.broadcast %7 : f32 to vector<8x16xf32>
    %10 = arith.mulf %8, %9 : vector<8x16xf32>
    %11 = arith.addf %6, %10 : vector<8x16xf32>
    %cst = arith.constant 0.000000e+00 : f32
    %12 = vector.broadcast %cst : f32 to vector<8x16xf32>
    %13 = arith.cmpf oeq, %2, %12 : vector<8x16xf32>
    %cst_4 = arith.constant -1.000000e+08 : f32
    %14 = vector.broadcast %cst_4 : f32 to vector<8x16xf32>
    %15 = arith.select %13, %14, %11 : vector<8x16xi1>, vector<8x16xf32>
    %c0_5 = arith.constant 0 : index
    %c0_6 = arith.constant 0 : index
    %16 = vector.load %arg5[%c0_5, %c0_6] : memref<8x17xf32, #tpu.memory_space<vmem>>, vector<8x16xf32>
    tpu.vector_store %arg5[%c0_5, %c0_6], %15 {strides = array<i32>} : memref<8x17xf32, #tpu.memory_space<vmem>>, vector<8x16xf32>,
    %cst_7 = arith.constant 0.000000e+00 : f32
    %17 = vector.broadcast %cst_7 : f32 to vector<8x1xf32>
    %c0_8 = arith.constant 0 : index
    %c16 = arith.constant 16 : index
    %18 = vector.load %arg5[%c0_8, %c16] : memref<8x17xf32, #tpu.memory_space<vmem>>, vector<8x1xf32>
    tpu.vector_store %arg5[%c0_8, %c16], %17 {strides = array<i32>} : memref<8x17xf32, #tpu.memory_space<vmem>>, vector<8x1xf32>,
    %c0_9 = arith.constant 0 : index
    %c0_10 = arith.constant 0 : index
    %19 = vector.load %arg4[%c0_9, %c0_10] : memref<8x1xi32, #tpu.memory_space<vmem>>, vector<8x1xi32>
    %cst_11 = arith.constant dense<0xFF800000> : vector<8xf32>
    %20 = vector.multi_reduction <maximumf>, %15, %cst_11 [1] : vector<8x16xf32> to vector<8xf32>
    %21 = vector.shape_cast %20 : vector<8xf32> to vector<8x1xf32>
    %cst_12 = arith.constant 0.000000e+00 : f32
    %22 = vector.broadcast %cst_12 : f32 to vector<8x1xf32>
    %23 = arith.maximumf %21, %22 : vector<8x1xf32>
    %24 = vector.broadcast %23 : vector<8x1xf32> to vector<8x16xf32>
    %25 = arith.subf %15, %24 : vector<8x16xf32>
    %26 = math.exp %25 : vector<8x16xf32>
    %cst_13 = arith.constant dense<0.000000e+00> : vector<8xf32>
    %27 = vector.multi_reduction <add>, %26, %cst_13 [1] : vector<8x16xf32> to vector<8xf32>
    %28 = vector.shape_cast %27 : vector<8xf32> to vector<8x1xf32>
    %cst_14 = arith.constant 0.000000e+00 : f32
    %29 = vector.broadcast %cst_14 : f32 to vector<8x1xf32>
    %30 = arith.subf %29, %23 : vector<8x1xf32>
    %31 = math.exp %30 : vector<8x1xf32>
    %32 = arith.addf %28, %31 : vector<8x1xf32>
    %33 = math.log %32 : vector<8x1xf32>
    %34 = arith.addf %23, %33 : vector<8x1xf32>
    %35 = tpu.iota {dimensions = array<i32: 1>} : vector<8x16xi32>
    %36 = vector.broadcast %19 : vector<8x1xi32> to vector<8x16xi32>
    %37 = arith.cmpi eq, %35, %36 : vector<8x16xi32>
    %cst_15 = arith.constant 0.000000e+00 : f32
    %38 = vector.broadcast %cst_15 : f32 to vector<8x16xf32>
    %39 = arith.select %37, %15, %38 : vector<8x16xi1>, vector<8x16xf32>
    %cst_16 = arith.constant dense<0.000000e+00> : vector<8xf32>
    %40 = vector.multi_reduction <add>, %39, %cst_16 [1] : vector<8x16xf32> to vector<8xf32>
    %41 = vector.shape_cast %40 : vector<8xf32> to vector<8x1xf32>
    %c16_i32 = arith.constant 16 : i32
    %42 = vector.broadcast %c16_i32 : i32 to vector<8x1xi32>
    %43 = arith.cmpi eq, %19, %42 : vector<8x1xi32>
    %cst_17 = arith.constant 0.000000e+00 : f32
    %44 = vector.broadcast %cst_17 : f32 to vector<8x1xf32>
    %45 = arith.select %43, %44, %41 : vector<8x1xi1>, vector<8x1xf32>
    %c8_i32 = arith.constant 8 : i32
    %46 = arith.muli %arg0, %c8_i32 : i32
    %47 = tpu.iota {dimensions = array<i32: 0>} : vector<8x1xi32>
    %48 = vector.broadcast %46 : i32 to vector<8x1xi32>
    %49 = arith.addi %48, %47 : vector<8x1xi32>
    %c8_i32_18 = arith.constant 8 : i32
    %50 = vector.broadcast %c8_i32_18 : i32 to vector<8x1xi32>
    %51 = arith.cmpi slt, %49, %50 : vector<8x1xi32>
    %52 = arith.subf %34, %45 : vector<8x1xf32>
    %cst_19 = arith.constant 0.000000e+00 : f32
    %53 = vector.broadcast %cst_19 : f32 to vector<8x1xf32>
    %54 = arith.select %51, %52, %53 : vector<8x1xi1>, vector<8x1xf32>
    %55 = vector.shape_cast %54 : vector<8x1xf32> to vector<1x8x1xf32>
    %cst_20 = arith.constant dense<0.000000e+00> : vector<1xf32>
    %56 = vector.multi_reduction <add>, %55, %cst_20 [1, 2] : vector<1x8x1xf32> to vector<1xf32>
    %57 = vector.shape_cast %56 : vector<1xf32> to vector<1x1x1xf32>
    %58 = vector.extract %57[0, 0, 0] : f32 from vector<1x1x1xf32>
    %cst_21 = arith.constant 9.765625E-4 : f32
    %59 = arith.mulf %58, %cst_21 : f32
    %60 = vector.broadcast %59 : f32 to vector<8x128xf32>
    %c0_22 = arith.constant 0 : index
    %c0_23 = arith.constant 0 : index
    %61 = vector.load %arg6[%c0_22, %c0_23] : memref<8x128xf32, #tpu.memory_space<vmem>>, vector<8x128xf32>
    tpu.vector_store %arg6[%c0_22, %c0_23], %60 {strides = array<i32>} : memref<8x128xf32, #tpu.memory_space<vmem>>, vector<8x128xf32>,
    return
  }
  func.func @transform_0(%arg0: i32) -> i32 {
    %c0_i32 = arith.constant 0 : i32
    %c0_i32_0 = arith.constant 0 : i32
    return %c0_i32 : i32
  }
  func.func @transform_1(%arg0: i32) -> (i32, i32) {
    %c0_i32 = arith.constant 0 : i32
    %c0_i32_0 = arith.constant 0 : i32
    return %arg0, %c0_i32 : i32, i32
  }
  func.func @transform_2(%arg0: i32) -> (i32, i32) {
    %c0_i32 = arith.constant 0 : i32
    %c0_i32_0 = arith.constant 0 : i32
    return %arg0, %c0_i32 : i32, i32
  }
  func.func @transform_3(%arg0: i32) -> (i32, i32) {
    %c0_i32 = arith.constant 0 : i32
    %c0_i32_0 = arith.constant 0 : i32
    return %arg0, %c0_i32 : i32, i32
  }
  func.func @transform_4(%arg0: i32) -> (i32, i32) {
    %c0_i32 = arith.constant 0 : i32
    %c0_i32_0 = arith.constant 0 : i32
    return %arg0, %c0_i32 : i32, i32
  }
  func.func @transform_5(%arg0: i32) -> (i32, i32) {
    %c0_i32 = arith.constant 0 : i32
    %c0_i32_0 = arith.constant 0 : i32
    return %arg0, %c0_i32 : i32, i32
  }
}

</mosaic_0001>

<llo_original>
// kernel: tpu_custom_call.1
$region0: #{tpu_custom_call.1}
  #allocation0 [shape = 'u32[]', space=smem, size = 0x4, offset = 0x4, fixed_abs, tag = 'smem constant byte address 0x4 - core index']
  #allocation1 [shape = 'u32[144,128]{1,0:T(1,128)}', space=vmem, size = 0x12000, scoped, tag = 'internal scratch']
  %s0 = inlined_call_operand.vmem [shape: f32[3], index: 0, kind: input, shape index: {}]
  %s1 = inlined_call_operand.vmem [shape: f32[8,16], index: 1, kind: input, shape index: {}]
  %s2 = inlined_call_operand.hbm [shape: f32[8,17], index: 2, kind: input, shape index: {}]
  %s3 = inlined_call_operand.vmem [shape: s32[8,1], index: 3, kind: input, shape index: {}]
  %s4 = inlined_call_operand.hbm [shape: f32[8,17], index: 4, kind: output, shape index: {0}]
  %s5 = inlined_call_operand.hbm [shape: f32[8,128], index: 5, kind: output, shape index: {1}]
  %6 = xla_tuple %s4, %s5
  %s7 = sld [smem:[#allocation0]]
  $region42: #{tpu_custom_call.1} parent=0
    _
  %s9 = ssub.s32 1, %s7
  %s10 = scalar_select 0, %s9, %s7
  $region1: #{tpu_custom_call.1} parent=0
    #allocation2 [shape = 'u8[512]{0}', space=smem, size = 0x200, scoped, tag = 'input window, operand 0, single buffered']
    #allocation3 [shape = 's32[1]{0}', space=sflag, size = 0x4, scoped, tag = 'scoped memory for tpu_custom_call.1']
    #allocation4 [shape = 's32[1]{0}', space=sflag, size = 0x4, scoped, tag = 'scoped memory for tpu_custom_call.1']
    #allocation5 [shape = 's32[1]{0}', space=sflag, size = 0x4, scoped, tag = 'scoped memory for tpu_custom_call.1']
    #allocation6 [shape = 'u8[4096]{0}', space=vmem, size = 0x1000, scoped, tag = 'input window, operand 2, single buffered']
    #allocation7 [shape = 'u8[4096]{0}', space=vmem, size = 0x1000, scoped, tag = 'output window, operand 0, single buffered']
    #allocation8 [shape = 'u8[4096]{0}', space=vmem, size = 0x1000, scoped, tag = 'output window, operand 1, single buffered']
    #allocation9 [shape = 's32[1]{0}', space=sflag, size = 0x4, scoped, tag = 'scoped memory for tpu_custom_call.1']
    %11 = vsyncpa [#allocation5], 0
    %12 = vsyncpa [#allocation3], 0
    %13 = vsyncpa [#allocation4], 0
    %14 = vsyncpa [#allocation9], 0
    // Predicated region
    $region2: #{tpu_custom_call.1} parent=1 // pred_check
      _
    $region3: #{tpu_custom_call.1} parent=1 // pred_check_branch
      %16 = sbr.rel (0) target = $region5
    $region4: #{tpu_custom_call.1} parent=1 // pred_region
      %s18 = ssub.s32 16, 16
      %19 = vsyncadd [#allocation5], %s18
      %s21 = sshll.u32 %s0, 4
      %s22 = int_to_ptr.vmem [resolvable:$true] %s21
      %24 = dma.vmem_to_smem %s22, 16, [#allocation2], [#allocation5]
    $region5: #{tpu_custom_call.1} parent=1 // pred_fallthru
      _
    // Predicated region
    $region6: #{tpu_custom_call.1} parent=1 // pred_check
      _
    $region7: #{tpu_custom_call.1} parent=1 // pred_check_branch
      %26 = sbr.rel (0) target = $region9
    $region8: #{tpu_custom_call.1} parent=1 // pred_region
      _
    $region9: #{tpu_custom_call.1} parent=1 // pred_fallthru
      _
    // Predicated region
    $region10: #{tpu_custom_call.1} parent=1 // pred_check
      _
    $region11: #{tpu_custom_call.1} parent=1 // pred_check_branch
      %28 = sbr.rel (0) target = $region13
    $region12: #{tpu_custom_call.1} parent=1 // pred_region
      %s30 = ssub.s32 128, 128
      %31 = vsyncadd [#allocation3], %s30
      %s33 = sshll.u32 [#allocation6], 4
      %s34 = int_to_ptr.vmem [resolvable:$true] %s33
      %36 = dma.hbm_to_vmem [thread:$0]  %s2, 128, %s34, [#allocation3]
    $region13: #{tpu_custom_call.1} parent=1 // pred_fallthru
      _
    // Predicated region
    $region14: #{tpu_custom_call.1} parent=1 // pred_check
      _
    $region15: #{tpu_custom_call.1} parent=1 // pred_check_branch
      %38 = sbr.rel (0) target = $region17
    $region16: #{tpu_custom_call.1} parent=1 // pred_region
      _
    $region17: #{tpu_custom_call.1} parent=1 // pred_fallthru
      _
    // Predicated region
    $region18: #{tpu_custom_call.1} parent=1 // pred_check
      _
    $region19: #{tpu_custom_call.1} parent=1 // pred_check_branch
      %40 = sbr.rel (0) target = $region21
    $region20: #{tpu_custom_call.1} parent=1 // pred_region
      %41 = dma.done [#allocation5], 16
    $region21: #{tpu_custom_call.1} parent=1 // pred_fallthru
      _
    // Predicated region
    $region22: #{tpu_custom_call.1} parent=1 // pred_check
      _
    $region23: #{tpu_custom_call.1} parent=1 // pred_check_branch
      %43 = sbr.rel (0) target = $region25
    $region24: #{tpu_custom_call.1} parent=1 // pred_region
      %44 = dma.done [#allocation3], 128
    $region25: #{tpu_custom_call.1} parent=1 // pred_fallthru
      _
    %45 = sfence
    %s46 = sld [smem:[#allocation2]]
    %s47 = sld [smem:[#allocation2 + $0x2]]
    %v48 = vld [vmem:[%s1] sm:$0xff]
    %v49 = vstv %s46
    %v50 = vmul.f32 %v48, %v49
    %v51 = vstv %s47
    %v52 = vadd.f32 %v50, %v51
    %s53 = sld [smem:[#allocation2 + $0x1]]
    %v54 = vld [vmem:[#allocation6] sm:$0xff]
    %v55 = vstv %s53
    %v56 = vmul.f32 %v54, %v55
    %v57 = vadd.f32 %v52, %v56
    %vm58 = vcmp.eq.f32.partialorder %v48, 0.0
    %v59 = vsel %vm58, -1e+08, %v57
    %vm60 = vcmask 130048
    %61 = vst.msk [vmem:[#allocation7] sm:$0xff] %vm60, %v59
    %vm62 = vcmask 138368
    %63 = vst.msk [vmem:[#allocation7] sm:$0xff] %vm62, 0.0
    %v64 = vld [vmem:[%s3] sm:$0xff]
    %v65 = vsel %vm60, %v59, -inf
    %66 = vmax.xlane.f32.xlu0 %v65
    %v67 = vpop.xlane.xlu0 %66
    %v68 = vmax.f32 %v67, 0.0
    %v69 = vsub.f32 %v59, %v68
    %v70 = vmul.f32 %v69, 1.442695
    %v71 = vpow.pop %v70
    %v72 = vsel %vm60, %v71, 0.0
    %73 = vadd.xlane.f32.xlu0 %v72
    %v74 = vpop.xlane.xlu0 %73
    %v75 = vsub.f32 0.0, %v68
    %v76 = vmul.f32 %v75, 1.442695
    %v77 = vpow.pop %v76
    %v78 = vadd.f32 %v74, %v77
    %v79 = vlog2.pop %v78
    %v80 = vmul.f32 %v79, 0.6931472
    %v81 = vadd.f32 %v68, %v80
    %v82 = vlaneseq
    %v83 = vand.u32 %v82, 127
    %84 = vset.pattern.permute.xlu0 0
    %85 = vperm.xlu0 %84, %v64
    %v86 = vpop.permute.xlu0 %85
    %vm87 = vcmp.eq.s32.totalorder %v83, %v86
    %v88 = vsel %vm87, %v59, 0.0
    %v89 = vsel %vm60, %v88, 0.0
    %90 = vadd.xlane.f32.xlu0 %v89
    %v91 = vpop.xlane.xlu0 %90
    %vm92 = vcmp.eq.s32.totalorder %v64, 16
    %v93 = vsel %vm92, 0.0, %v91
    %s94 = smul.u32 0, 8
    %v95 = vlaneseq
    %v96 = vshrl.u32 %v95, 7
    %v97 = vstv %s94
    %v98 = vadd.s32 %v97, %v96
    %vm99 = vcmp.lt.s32.totalorder %v98, 8
    %v100 = vsub.f32 %v81, %v93
    %v101 = vsel %vm99, %v100, 0.0
    %vm102 = vcmask 7168
    %v103 = vsel %vm102, %v101, 0.0
    %104 = vadd.xlane.f32.xlu0 %v103
    %v105 = vpop.xlane.xlu0 %104
    %v106 = vrot.slane %v105, 4
    %v107 = vadd.f32 %v105, %v106
    %v108 = vrot.slane %v107, 2
    %v109 = vadd.f32 %v107, %v108
    %v110 = vrot.slane %v109, 1
    %v111 = vadd.f32 %v109, %v110
    %s112 = vtos %v111
    %s113 = smul.f32 %s112, 0.0009765625
    %v114 = vstv %s113
    %115 = vst [vmem:[#allocation8] sm:$0xff] %v114
    // Predicated region
    $region26: #{tpu_custom_call.1} parent=1 // pred_check
      _
    $region27: #{tpu_custom_call.1} parent=1 // pred_check_branch
      %117 = sbr.rel (0) target = $region29
    $region28: #{tpu_custom_call.1} parent=1 // pred_region
      %s119 = ssub.s32 128, 128
      %120 = vsyncadd [#allocation4], %s119
      %s122 = sshll.u32 [#allocation7], 4
      %s123 = int_to_ptr.vmem [resolvable:$true] %s122
      %125 = dma.vmem_to_hbm [thread:$0]  %s123, 128, %s4, [#allocation4]
    $region29: #{tpu_custom_call.1} parent=1 // pred_fallthru
      _
    // Predicated region
    $region30: #{tpu_custom_call.1} parent=1 // pred_check
      _
    $region31: #{tpu_custom_call.1} parent=1 // pred_check_branch
      %127 = sbr.rel (0) target = $region33
    $region32: #{tpu_custom_call.1} parent=1 // pred_region
      %s129 = ssub.s32 128, 128
      %130 = vsyncadd [#allocation9], %s129
      %s132 = sshll.u32 [#allocation8], 4
      %s133 = int_to_ptr.vmem [resolvable:$true] %s132
      %135 = dma.vmem_to_hbm [thread:$0]  %s133, 128, %s5, [#allocation9]
    $region33: #{tpu_custom_call.1} parent=1 // pred_fallthru
      _
    // Predicated region
    $region34: #{tpu_custom_call.1} parent=1 // pred_check
      _
    $region35: #{tpu_custom_call.1} parent=1 // pred_check_branch
      %137 = sbr.rel (0) target = $region37
    $region36: #{tpu_custom_call.1} parent=1 // pred_region
      %138 = dma.done [#allocation4], 128
    $region37: #{tpu_custom_call.1} parent=1 // pred_fallthru
      _
    // Predicated region
    $region38: #{tpu_custom_call.1} parent=1 // pred_check
      _
    $region39: #{tpu_custom_call.1} parent=1 // pred_check_branch
      %140 = sbr.rel (0) target = $region41
    $region40: #{tpu_custom_call.1} parent=1 // pred_region
      %141 = dma.done [#allocation9], 128
    $region41: #{tpu_custom_call.1} parent=1 // pred_fallthru
      _
    %142 = vsyncpa [#allocation3], 1
    %143 = vsyncpa [#allocation4], 1
    %144 = vsyncpa [#allocation9], 1
    %145 = vsyncpa [#allocation5], 1

</llo_original>
